<compile_context>
chip_gen: v6e
topology: v6e:2x2x1
jax: 0.10.0
libtpu: 0.0.40
codegen_flags: <defaults>
</compile_context>

<pallas_src>
import functools

import jax
import jax.numpy as jnp
from jax.experimental import pallas as pl
from jax.experimental.pallas import tpu as pltpu


def _bam_kernel(xr_ref, xi_ref, or_ref, oi_ref, *, hw, scale):
    """Fused BAM attention on a tile of spatial rows.

    xr_ref/xi_ref: (TR, HW) real / imag planes, one (b, c) plane per row.
    or_ref/oi_ref: (TR, HW) attended outputs.
    """
    inv_hw = 1.0 / hw
    inv_n = 1.0 / (hw - 1)

    def attend(x):
        x = x.astype(jnp.float32)
        # One-pass stats: sum(x) and sum(x*x) -> mean and sum((x-mean)^2).
        s1 = jnp.sum(x, axis=-1, keepdims=True)
        s2 = jnp.sum(x * x, axis=-1, keepdims=True)
        mean = s1 * inv_hw
        sum_d = s2 - mean * s1            # == sum((x - mean)^2)
        v = sum_d * inv_n
        d = jnp.square(x - mean)
        inv_denom = 1.0 / (4.0 * (v + scale))   # (TR, 1) — cheap reciprocal
        att = d * inv_denom + 0.5
        return att * x

    or_ref[...] = attend(xr_ref[...]).astype(or_ref.dtype)
    oi_ref[...] = attend(xi_ref[...]).astype(oi_ref.dtype)


def bam(x, *, scale=1e-4):
    """BAM forward.

    Args:
      x: (B, C, H, W) complex array (complex64), like the PyTorch module.
    Returns:
      (B, C, H, W) complex64: att_r*real + 1j*att_i*imag
    """
    B, C, H, W = x.shape
    hw = H * W
    assert hw > 1, "need H*W > 1 (PyTorch divides by H*W - 1)"

    xr = jnp.real(x).astype(jnp.float32).reshape(B * C, hw)
    xi = jnp.imag(x).astype(jnp.float32).reshape(B * C, hw)
    rows = B * C

    # --- adaptive row tile: multiple of 8, ~<=2 MiB per f32 tile, <=512 rows ---
    bytes_per_row = hw * 4
    tr = max(8, ((2 << 20) // bytes_per_row) // 8 * 8)
    tr = min(512, tr)
    rows_r8 = ((rows + 7) // 8) * 8
    tr = min(tr, rows_r8)
    # TODO(synk): for very large spatial planes (H*W*4B per row approaching VMEM),
    # additionally tile the H*W axis with a two-pass reduction across the grid.

    n_pad = (-rows) % tr
    if n_pad:
        xr = jnp.pad(xr, ((0, n_pad), (0, 0)))
        xi = jnp.pad(xi, ((0, n_pad), (0, 0)))
    rows_total = xr.shape[0]
    grid = (rows_total // tr,)

    # VMEM: 2 inputs + 2 outputs, each double-buffered, plus headroom.
    tile_bytes = tr * hw * 4
    vmem_limit = min(128 * 1024 * 1024, 8 * tile_bytes + (4 << 20))

    row_spec = pl.BlockSpec((tr, hw), lambda i: (i, 0))
    out_r, out_i = pl.pallas_call(
        functools.partial(_bam_kernel, hw=hw, scale=scale),
        out_shape=(
            jax.ShapeDtypeStruct((rows_total, hw), jnp.float32),
            jax.ShapeDtypeStruct((rows_total, hw), jnp.float32),
        ),
        grid_spec=pltpu.PrefetchScalarGridSpec(
            num_scalar_prefetch=0,
            grid=grid,
            in_specs=[row_spec, row_spec],
            out_specs=[row_spec, row_spec],
        ),
        compiler_params=pltpu.CompilerParams(
            dimension_semantics=("parallel",),
            vmem_limit_bytes=int(vmem_limit),
        ),
    )(xr, xi)

    out_r = out_r[:rows].reshape(B, C, H, W)
    out_i = out_i[:rows].reshape(B, C, H, W)
    return jax.lax.complex(out_r, out_i)


def _reference(x, scale=1e-4):
    """Pure-JAX reference mirroring the PyTorch forward exactly."""
    n = x.shape[2] * x.shape[3] - 1
    t_real = jnp.real(x)
    t_imag = jnp.imag(x)
    d_r = jnp.square(t_real - jnp.mean(t_real, axis=(2, 3), keepdims=True))
    d_i = jnp.square(t_imag - jnp.mean(t_imag, axis=(2, 3), keepdims=True))
    v_r = jnp.sum(d_r, axis=(2, 3), keepdims=True) / n
    v_i = jnp.sum(d_i, axis=(2, 3), keepdims=True) / n
    att_r = d_r / (4.0 * (v_r + scale)) + 0.5
    att_i = d_i / (4.0 * (v_i + scale)) + 0.5
    return jax.lax.complex(att_r * t_real, att_i * t_imag)


if __name__ == "__main__":
    key = jax.random.PRNGKey(0)
    k_r, k_i = jax.random.split(key, 2)

    B, C, H, W = 2, 4, 16, 16
    x_real = jax.random.normal(k_r, (B, C, H, W), dtype=jnp.float32)
    x_imag = jax.random.normal(k_i, (B, C, H, W), dtype=jnp.float32)
    x = jax.lax.complex(x_real, x_imag)          # complex64 input, like torch

    out = bam(x)
    out = jax.block_until_ready(out)

    ref = _reference(x)
    assert out.shape == (B, C, H, W), out.shape
    assert out.dtype == jnp.complex64, out.dtype
    max_err = float(jnp.max(jnp.abs(out - ref)))
    assert jnp.allclose(out, ref, atol=1e-4, rtol=1e-4), max_err

    print("KERNEL_OK")
</pallas_src>

<mosaic_0001>
module attributes {stable_mosaic.version = 11 : i64} {
  func.func @_bam_kernel(%arg0: i32, %arg1: memref<8x256xf32, #tpu.memory_space<vmem>>, %arg2: memref<8x256xf32, #tpu.memory_space<vmem>>, %arg3: memref<8x256xf32, #tpu.memory_space<vmem>>, %arg4: memref<8x256xf32, #tpu.memory_space<vmem>>) attributes {dimension_semantics = [#tpu.dimension_semantics<parallel>], iteration_bounds = array<i64: 1>, scalar_prefetch = 0 : i64, scratch_operands = 0 : i64, tpu.core_type = #tpu.core_type<tc>, window_params = [{transform_indices = @transform_0, window_bounds = array<i64: 8, 256>}, {transform_indices = @transform_1, window_bounds = array<i64: 8, 256>}, {transform_indices = @transform_2, window_bounds = array<i64: 8, 256>}, {transform_indices = @transform_3, window_bounds = array<i64: 8, 256>}]} {
    %c0 = arith.constant 0 : index
    %c0_0 = arith.constant 0 : index
    %0 = vector.load %arg1[%c0, %c0_0] : memref<8x256xf32, #tpu.memory_space<vmem>>, vector<8x256xf32>
    %cst = arith.constant dense<0.000000e+00> : vector<8xf32>
    %1 = vector.multi_reduction <add>, %0, %cst [1] : vector<8x256xf32> to vector<8xf32>
    %2 = vector.shape_cast %1 : vector<8xf32> to vector<8x1xf32>
    %3 = arith.mulf %0, %0 : vector<8x256xf32>
    %cst_1 = arith.constant dense<0.000000e+00> : vector<8xf32>
    %4 = vector.multi_reduction <add>, %3, %cst_1 [1] : vector<8x256xf32> to vector<8xf32>
    %5 = vector.shape_cast %4 : vector<8xf32> to vector<8x1xf32>
    %cst_2 = arith.constant 3.906250e-03 : f32
    %6 = vector.broadcast %cst_2 : f32 to vector<8x1xf32>
    %7 = arith.mulf %2, %6 : vector<8x1xf32>
    %8 = arith.mulf %7, %2 : vector<8x1xf32>
    %9 = arith.subf %5, %8 : vector<8x1xf32>
    %cst_3 = arith.constant 0.00392156886 : f32
    %10 = vector.broadcast %cst_3 : f32 to vector<8x1xf32>
    %11 = arith.mulf %9, %10 : vector<8x1xf32>
    %12 = vector.broadcast %7 : vector<8x1xf32> to vector<8x256xf32>
    %13 = arith.subf %0, %12 : vector<8x256xf32>
    %14 = arith.mulf %13, %13 : vector<8x256xf32>
    %cst_4 = arith.constant 9.99999974E-5 : f32
    %15 = vector.broadcast %cst_4 : f32 to vector<8x1xf32>
    %16 = arith.addf %11, %15 : vector<8x1xf32>
    %cst_5 = arith.constant 4.000000e+00 : f32
    %17 = vector.broadcast %cst_5 : f32 to vector<8x1xf32>
    %18 = arith.mulf %17, %16 : vector<8x1xf32>
    %cst_6 = arith.constant 1.000000e+00 : f32
    %19 = vector.broadcast %cst_6 : f32 to vector<8x1xf32>
    %20 = arith.divf %19, %18 : vector<8x1xf32>
    %21 = vector.broadcast %20 : vector<8x1xf32> to vector<8x256xf32>
    %22 = arith.mulf %14, %21 : vector<8x256xf32>
    %cst_7 = arith.constant 5.000000e-01 : f32
    %23 = vector.broadcast %cst_7 : f32 to vector<8x256xf32>
    %24 = arith.addf %22, %23 : vector<8x256xf32>
    %25 = arith.mulf %24, %0 : vector<8x256xf32>
    %c0_8 = arith.constant 0 : index
    %c0_9 = arith.constant 0 : index
    %26 = vector.load %arg3[%c0_8, %c0_9] : memref<8x256xf32, #tpu.memory_space<vmem>>, vector<8x256xf32>
    tpu.vector_store %arg3[%c0_8, %c0_9], %25 {strides = array<i32>} : memref<8x256xf32, #tpu.memory_space<vmem>>, vector<8x256xf32>,
    %c0_10 = arith.constant 0 : index
    %c0_11 = arith.constant 0 : index
    %27 = vector.load %arg2[%c0_10, %c0_11] : memref<8x256xf32, #tpu.memory_space<vmem>>, vector<8x256xf32>
    %cst_12 = arith.constant dense<0.000000e+00> : vector<8xf32>
    %28 = vector.multi_reduction <add>, %27, %cst_12 [1] : vector<8x256xf32> to vector<8xf32>
    %29 = vector.shape_cast %28 : vector<8xf32> to vector<8x1xf32>
    %30 = arith.mulf %27, %27 : vector<8x256xf32>
    %cst_13 = arith.constant dense<0.000000e+00> : vector<8xf32>
    %31 = vector.multi_reduction <add>, %30, %cst_13 [1] : vector<8x256xf32> to vector<8xf32>
    %32 = vector.shape_cast %31 : vector<8xf32> to vector<8x1xf32>
    %cst_14 = arith.constant 3.906250e-03 : f32
    %33 = vector.broadcast %cst_14 : f32 to vector<8x1xf32>
    %34 = arith.mulf %29, %33 : vector<8x1xf32>
    %35 = arith.mulf %34, %29 : vector<8x1xf32>
    %36 = arith.subf %32, %35 : vector<8x1xf32>
    %cst_15 = arith.constant 0.00392156886 : f32
    %37 = vector.broadcast %cst_15 : f32 to vector<8x1xf32>
    %38 = arith.mulf %36, %37 : vector<8x1xf32>
    %39 = vector.broadcast %34 : vector<8x1xf32> to vector<8x256xf32>
    %40 = arith.subf %27, %39 : vector<8x256xf32>
    %41 = arith.mulf %40, %40 : vector<8x256xf32>
    %cst_16 = arith.constant 9.99999974E-5 : f32
    %42 = vector.broadcast %cst_16 : f32 to vector<8x1xf32>
    %43 = arith.addf %38, %42 : vector<8x1xf32>
    %cst_17 = arith.constant 4.000000e+00 : f32
    %44 = vector.broadcast %cst_17 : f32 to vector<8x1xf32>
    %45 = arith.mulf %44, %43 : vector<8x1xf32>
    %cst_18 = arith.constant 1.000000e+00 : f32
    %46 = vector.broadcast %cst_18 : f32 to vector<8x1xf32>
    %47 = arith.divf %46, %45 : vector<8x1xf32>
    %48 = vector.broadcast %47 : vector<8x1xf32> to vector<8x256xf32>
    %49 = arith.mulf %41, %48 : vector<8x256xf32>
    %cst_19 = arith.constant 5.000000e-01 : f32
    %50 = vector.broadcast %cst_19 : f32 to vector<8x256xf32>
    %51 = arith.addf %49, %50 : vector<8x256xf32>
    %52 = arith.mulf %51, %27 : vector<8x256xf32>
    %c0_20 = arith.constant 0 : index
    %c0_21 = arith.constant 0 : index
    %53 = vector.load %arg4[%c0_20, %c0_21] : memref<8x256xf32, #tpu.memory_space<vmem>>, vector<8x256xf32>
    tpu.vector_store %arg4[%c0_20, %c0_21], %52 {strides = array<i32>} : memref<8x256xf32, #tpu.memory_space<vmem>>, vector<8x256xf32>,
    return
  }
  func.func @transform_0(%arg0: i32) -> (i32, i32) {
    %c0_i32 = arith.constant 0 : i32
    %c0_i32_0 = arith.constant 0 : i32
    return %arg0, %c0_i32 : i32, i32
  }
  func.func @transform_1(%arg0: i32) -> (i32, i32) {
    %c0_i32 = arith.constant 0 : i32
    %c0_i32_0 = arith.constant 0 : i32
    return %arg0, %c0_i32 : i32, i32
  }
  func.func @transform_2(%arg0: i32) -> (i32, i32) {
    %c0_i32 = arith.constant 0 : i32
    %c0_i32_0 = arith.constant 0 : i32
    return %arg0, %c0_i32 : i32, i32
  }
  func.func @transform_3(%arg0: i32) -> (i32, i32) {
    %c0_i32 = arith.constant 0 : i32
    %c0_i32_0 = arith.constant 0 : i32
    return %arg0, %c0_i32 : i32, i32
  }
}

</mosaic_0001>

<llo_original>
// kernel: tpu_custom_call.1
$region0: #{tpu_custom_call.1}
  #allocation0 [shape = 'u32[]', space=smem, size = 0x4, offset = 0x4, fixed_abs, tag = 'smem constant byte address 0x4 - core index']
  #allocation1 [shape = 'u32[144,128]{1,0:T(1,128)}', space=vmem, size = 0x12000, scoped, tag = 'internal scratch']
  %s0 = inlined_call_operand.hbm [shape: f32[8,256], index: 0, kind: input, shape index: {}]
  %s1 = inlined_call_operand.hbm [shape: f32[8,256], index: 1, kind: input, shape index: {}]
  %s2 = inlined_call_operand.hbm [shape: f32[8,256], index: 2, kind: output, shape index: {0}]
  %s3 = inlined_call_operand.hbm [shape: f32[8,256], index: 3, kind: output, shape index: {1}]
  %4 = xla_tuple %s2, %s3
  %s5 = sld [smem:[#allocation0]]
  $region34: #{tpu_custom_call.1} parent=0
    _
  %s7 = ssub.s32 1, %s5
  %s8 = scalar_select 0, %s7, %s5
  $region1: #{tpu_custom_call.1} parent=0
    #allocation2 [shape = 'u8[8192]{0}', space=vmem, size = 0x2000, scoped, tag = 'input window, operand 0, single buffered']
    #allocation3 [shape = 's32[1]{0}', space=sflag, size = 0x4, scoped, tag = 'scoped memory for tpu_custom_call.1']
    #allocation4 [shape = 's32[1]{0}', space=sflag, size = 0x4, scoped, tag = 'scoped memory for tpu_custom_call.1']
    #allocation5 [shape = 'u8[8192]{0}', space=vmem, size = 0x2000, scoped, tag = 'input window, operand 1, single buffered']
    #allocation6 [shape = 's32[1]{0}', space=sflag, size = 0x4, scoped, tag = 'scoped memory for tpu_custom_call.1']
    #allocation7 [shape = 'u8[8192]{0}', space=vmem, size = 0x2000, scoped, tag = 'output window, operand 0, single buffered']
    #allocation8 [shape = 'u8[8192]{0}', space=vmem, size = 0x2000, scoped, tag = 'output window, operand 1, single buffered']
    #allocation9 [shape = 's32[1]{0}', space=sflag, size = 0x4, scoped, tag = 'scoped memory for tpu_custom_call.1']
    %9 = vsyncpa [#allocation3], 0
    %10 = vsyncpa [#allocation6], 0
    %11 = vsyncpa [#allocation4], 0
    %12 = vsyncpa [#allocation9], 0
    // Predicated region
    $region2: #{tpu_custom_call.1} parent=1 // pred_check
      _
    $region3: #{tpu_custom_call.1} parent=1 // pred_check_branch
      %14 = sbr.rel (0) target = $region5
    $region4: #{tpu_custom_call.1} parent=1 // pred_region
      %s16 = ssub.s32 256, 256
      %17 = vsyncadd [#allocation3], %s16
      %s19 = sshll.u32 [#allocation2], 4
      %s20 = int_to_ptr.vmem [resolvable:$true] %s19
      %22 = dma.hbm_to_vmem [thread:$0]  %s0, 256, %s20, [#allocation3]
    $region5: #{tpu_custom_call.1} parent=1 // pred_fallthru
      _
    // Predicated region
    $region6: #{tpu_custom_call.1} parent=1 // pred_check
      _
    $region7: #{tpu_custom_call.1} parent=1 // pred_check_branch
      %24 = sbr.rel (0) target = $region9
    $region8: #{tpu_custom_call.1} parent=1 // pred_region
      %s26 = ssub.s32 256, 256
      %27 = vsyncadd [#allocation6], %s26
      %s29 = sshll.u32 [#allocation5], 4
      %s30 = int_to_ptr.vmem [resolvable:$true] %s29
      %32 = dma.hbm_to_vmem [thread:$0]  %s1, 256, %s30, [#allocation6]
    $region9: #{tpu_custom_call.1} parent=1 // pred_fallthru
      _
    // Predicated region
    $region10: #{tpu_custom_call.1} parent=1 // pred_check
      _
    $region11: #{tpu_custom_call.1} parent=1 // pred_check_branch
      %34 = sbr.rel (0) target = $region13
    $region12: #{tpu_custom_call.1} parent=1 // pred_region
      %35 = dma.done [#allocation3], 256
    $region13: #{tpu_custom_call.1} parent=1 // pred_fallthru
      _
    // Predicated region
    $region14: #{tpu_custom_call.1} parent=1 // pred_check
      _
    $region15: #{tpu_custom_call.1} parent=1 // pred_check_branch
      %37 = sbr.rel (0) target = $region17
    $region16: #{tpu_custom_call.1} parent=1 // pred_region
      %38 = dma.done [#allocation6], 256
    $region17: #{tpu_custom_call.1} parent=1 // pred_fallthru
      _
    %v39 = vld [vmem:[#allocation2] sm:$0xff]
    %v40 = vld [vmem:[#allocation2 + $0x8] sm:$0xff]
    %v41 = vadd.f32 %v39, %v40
    %42 = vadd.xlane.f32.xlu0 %v41
    %v43 = vpop.xlane.xlu0 %42
    %v44 = vmul.f32 %v39, %v39
    %v45 = vmul.f32 %v40, %v40
    %v46 = vadd.f32 %v44, %v45
    %47 = vadd.xlane.f32.xlu0 %v46
    %v48 = vpop.xlane.xlu0 %47
    %v49 = vmul.f32 %v43, 0.00390625
    %v50 = vmul.f32 %v49, %v43
    %v51 = vsub.f32 %v48, %v50
    %v52 = vmul.f32 %v51, 0.003921569
    %v53 = vsub.f32 %v39, %v49
    %v54 = vsub.f32 %v40, %v49
    %v55 = vmul.f32 %v53, %v53
    %v56 = vmul.f32 %v54, %v54
    %v57 = vadd.f32 %v52, 0.0001
    %v58 = vmul.f32 %v57, 4.0
    %v59 = vrcp.pop %v58
    %v60 = vmul.f32 1.0, %v59
    %v61 = vmul.f32 %v55, %v60
    %v62 = vmul.f32 %v56, %v60
    %v63 = vadd.f32 %v61, 0.5
    %v64 = vadd.f32 %v62, 0.5
    %v65 = vmul.f32 %v63, %v39
    %v66 = vmul.f32 %v64, %v40
    %67 = vst [vmem:[#allocation7] sm:$0xff] %v65
    %68 = vst [vmem:[#allocation7 + $0x8] sm:$0xff] %v66
    %v69 = vld [vmem:[#allocation5] sm:$0xff]
    %v70 = vld [vmem:[#allocation5 + $0x8] sm:$0xff]
    %v71 = vadd.f32 %v69, %v70
    %72 = vadd.xlane.f32.xlu0 %v71
    %v73 = vpop.xlane.xlu0 %72
    %v74 = vmul.f32 %v69, %v69
    %v75 = vmul.f32 %v70, %v70
    %v76 = vadd.f32 %v74, %v75
    %77 = vadd.xlane.f32.xlu0 %v76
    %v78 = vpop.xlane.xlu0 %77
    %v79 = vmul.f32 %v73, 0.00390625
    %v80 = vmul.f32 %v79, %v73
    %v81 = vsub.f32 %v78, %v80
    %v82 = vmul.f32 %v81, 0.003921569
    %v83 = vsub.f32 %v69, %v79
    %v84 = vsub.f32 %v70, %v79
    %v85 = vmul.f32 %v83, %v83
    %v86 = vmul.f32 %v84, %v84
    %v87 = vadd.f32 %v82, 0.0001
    %v88 = vmul.f32 %v87, 4.0
    %v89 = vrcp.pop %v88
    %v90 = vmul.f32 1.0, %v89
    %v91 = vmul.f32 %v85, %v90
    %v92 = vmul.f32 %v86, %v90
    %v93 = vadd.f32 %v91, 0.5
    %v94 = vadd.f32 %v92, 0.5
    %v95 = vmul.f32 %v93, %v69
    %v96 = vmul.f32 %v94, %v70
    %97 = vst [vmem:[#allocation8] sm:$0xff] %v95
    %98 = vst [vmem:[#allocation8 + $0x8] sm:$0xff] %v96
    // Predicated region
    $region18: #{tpu_custom_call.1} parent=1 // pred_check
      _
    $region19: #{tpu_custom_call.1} parent=1 // pred_check_branch
      %100 = sbr.rel (0) target = $region21
    $region20: #{tpu_custom_call.1} parent=1 // pred_region
      %s102 = ssub.s32 256, 256
      %103 = vsyncadd [#allocation4], %s102
      %s105 = sshll.u32 [#allocation7], 4
      %s106 = int_to_ptr.vmem [resolvable:$true] %s105
      %108 = dma.vmem_to_hbm [thread:$0]  %s106, 256, %s2, [#allocation4]
    $region21: #{tpu_custom_call.1} parent=1 // pred_fallthru
      _
    // Predicated region
    $region22: #{tpu_custom_call.1} parent=1 // pred_check
      _
    $region23: #{tpu_custom_call.1} parent=1 // pred_check_branch
      %110 = sbr.rel (0) target = $region25
    $region24: #{tpu_custom_call.1} parent=1 // pred_region
      %s112 = ssub.s32 256, 256
      %113 = vsyncadd [#allocation9], %s112
      %s115 = sshll.u32 [#allocation8], 4
      %s116 = int_to_ptr.vmem [resolvable:$true] %s115
      %118 = dma.vmem_to_hbm [thread:$0]  %s116, 256, %s3, [#allocation9]
    $region25: #{tpu_custom_call.1} parent=1 // pred_fallthru
      _
    // Predicated region
    $region26: #{tpu_custom_call.1} parent=1 // pred_check
      _
    $region27: #{tpu_custom_call.1} parent=1 // pred_check_branch
      %120 = sbr.rel (0) target = $region29
    $region28: #{tpu_custom_call.1} parent=1 // pred_region
      %121 = dma.done [#allocation4], 256
    $region29: #{tpu_custom_call.1} parent=1 // pred_fallthru
      _
    // Predicated region
    $region30: #{tpu_custom_call.1} parent=1 // pred_check
      _
    $region31: #{tpu_custom_call.1} parent=1 // pred_check_branch
      %123 = sbr.rel (0) target = $region33
    $region32: #{tpu_custom_call.1} parent=1 // pred_region
      %124 = dma.done [#allocation9], 256
    $region33: #{tpu_custom_call.1} parent=1 // pred_fallthru
      _
    %125 = vsyncpa [#allocation3], 1
    %126 = vsyncpa [#allocation6], 1
    %127 = vsyncpa [#allocation4], 1
    %128 = vsyncpa [#allocation9], 1

</llo_original>
